<compile_context>
chip_gen: v6e
topology: v6e:2x2x1
jax: 0.10.0
libtpu: 0.0.40
codegen_flags: <defaults>
</compile_context>

<pallas_src>
import functools

import jax
import jax.numpy as jnp
from jax.experimental import pallas as pl
from jax.experimental.pallas import tpu as pltpu

_LANE = 128          # TPU vreg lane width
_SUBLANE = 8         # TPU vreg sublane height (f32)
_NEG = -1e30         # "minus infinity" bias for padded logit lanes (exp -> 0)
_MAX_TILE = 2048     # max batch rows per grid step (overhead amortization)
_SMALL_BATCH = 1024  # at or below this, skip the grid/pipeline entirely


def _round_up(n, m):
    return ((n + m - 1) // m) * m


def policy_net_kernel(x_ref, w1_ref, b1_ref, w2_ref, b2_ref, out_ref, *, num_actions):
    # x: (tb, Dp)   w1: (Dp, Hp)  b1: (1, Hp)   w2: (Hp, Ap)  b2: (1, Ap)
    # out: (tb, num_actions)   (Dp/Hp/Ap are the sublane/lane-padded sizes)
    x = x_ref[...]

    # Linear1 + ReLU (MXU matmul, VPU max).  Padded hidden lanes are exactly 0.
    h = jnp.dot(x, w1_ref[...], preferred_element_type=jnp.float32) + b1_ref[...]
    h = jnp.maximum(h, 0.0)

    # Linear2.  Padded action lanes get logit = -1e30 from the padded bias.
    logits = jnp.dot(h, w2_ref[...], preferred_element_type=jnp.float32) + b2_ref[...]

    # Numerically stable softmax over the (padded) action lane dim.  Padded lanes
    # underflow to exp(...) == 0, so they contribute nothing to the denominator.
    m = jnp.max(logits, axis=-1, keepdims=True)
    e = jnp.exp(logits - m)
    denom = jnp.sum(e, axis=-1, keepdims=True)
    probs = e / denom                  # exact divide: rows sum to 1 within f32 rounding

    # Store only the real action columns -> narrow HBM writeback, no padded lanes
    # and no wrapper-side slice copy.
    out_ref[...] = probs[:, :num_actions].astype(out_ref.dtype)


def pad_params(w1, b1, w2, b2):
    """Pad (in, out)-layout params to sublane/lane-aligned sizes."""
    d_in, h = w1.shape
    _, a = w2.shape
    dp = _round_up(d_in, _SUBLANE)                 # K dim on native 8-sublane tiles
    hp = _round_up(max(h, _LANE), _LANE)
    ap = _round_up(max(a, _LANE), _LANE)
    w1p = jnp.zeros((dp, hp), jnp.float32).at[:d_in, :h].set(w1)
    b1p = jnp.zeros((1, hp), jnp.float32).at[:, :h].set(b1.reshape(1, h))
    w2p = jnp.zeros((hp, ap), jnp.float32).at[:h, :a].set(w2)
    # Padded action lanes carry a huge negative bias so softmax ignores them.
    b2p = jnp.full((1, ap), _NEG, jnp.float32).at[:, :a].set(b2.reshape(1, a))
    return w1p, b1p, w2p, b2p


def _pick_batch_tile(B):
    # Amortize the ~0.35us per-grid-step overhead with large tiles, but keep an
    # even number of >= 2 steps so v7x's two TensorCores each get equal work.
    steps = max(2, pl.cdiv(B, _MAX_TILE))
    if steps % 2:
        steps += 1
    return _round_up(pl.cdiv(B, steps), _SUBLANE)


@functools.partial(jax.jit, static_argnames=("num_actions",))
def policy_network_forward(state, w1p, b1p, w2p, b2p, *, num_actions):
    """state: (B, num_inputs) f32 -> probs: (B, num_actions) f32 (rows sum to 1)."""
    B, d_in = state.shape
    dp = w1p.shape[0]
    if dp != d_in:
        # Zero-pad the K dim to the sublane-aligned width used by w1p.
        state = jnp.pad(state, ((0, 0), (0, dp - d_in)))

    kernel = functools.partial(policy_net_kernel, num_actions=num_actions)

    if B <= _SMALL_BATCH:
        # Tiny/typical RL-step case: one whole-array VMEM invocation, no grid,
        # no pipeline plumbing -- launch overhead is the only cost that matters.
        vmem = pl.BlockSpec(memory_space=pltpu.MemorySpace.VMEM)
        return pl.pallas_call(
            kernel,
            out_shape=jax.ShapeDtypeStruct((B, num_actions), jnp.float32),
            in_specs=[vmem] * 5,
            out_specs=vmem,
        )(state, w1p, b1p, w2p, b2p)

    # Large rollout batches: tile the batch dim so BlockSpec double-buffering
    # overlaps HBM traffic with compute; "parallel" lets v7x split the (>= 2,
    # even-count) grid across its two TensorCores.  Constant-index weight blocks
    # stay resident in VMEM across all steps.  If B is not a multiple of tb the
    # ragged last block reads some out-of-range input rows; softmax is row-wise
    # and those output rows are never written, so this is benign -- do not "fix".
    tb = _pick_batch_tile(B)
    return pl.pallas_call(
        kernel,
        out_shape=jax.ShapeDtypeStruct((B, num_actions), jnp.float32),
        grid=(pl.cdiv(B, tb),),
        in_specs=[
            pl.BlockSpec((tb, dp), lambda i: (i, 0)),
            pl.BlockSpec(w1p.shape, lambda i: (0, 0)),
            pl.BlockSpec(b1p.shape, lambda i: (0, 0)),
            pl.BlockSpec(w2p.shape, lambda i: (0, 0)),
            pl.BlockSpec(b2p.shape, lambda i: (0, 0)),
        ],
        out_specs=pl.BlockSpec((tb, num_actions), lambda i: (i, 0)),
        compiler_params=pltpu.CompilerParams(
            dimension_semantics=("parallel",),
        ),
    )(state, w1p, b1p, w2p, b2p)


def init_params(key, num_inputs, num_actions, hidden_size):
    # Deterministic init mimicking nn.Linear's U(-1/sqrt(fan_in), 1/sqrt(fan_in)),
    # stored transposed ((in, out)) relative to torch.
    k1, k2, k3, k4 = jax.random.split(key, 4)
    lim1 = 1.0 / jnp.sqrt(jnp.float32(num_inputs))
    lim2 = 1.0 / jnp.sqrt(jnp.float32(hidden_size))
    w1 = jax.random.uniform(k1, (num_inputs, hidden_size), jnp.float32, -lim1, lim1)
    b1 = jax.random.uniform(k2, (1, hidden_size), jnp.float32, -lim1, lim1)
    w2 = jax.random.uniform(k3, (hidden_size, num_actions), jnp.float32, -lim2, lim2)
    b2 = jax.random.uniform(k4, (1, num_actions), jnp.float32, -lim2, lim2)
    return w1, b1, w2, b2


# TODO(synk): Adam optimizer state and the numpy-based get_action sampling are
# host-side training plumbing with no Pallas equivalent; only forward() is kerneled.


if __name__ == "__main__":
    num_inputs, num_actions, hidden_size = 4, 6, 32

    key = jax.random.PRNGKey(0)
    pkey, xkey, xkey2 = jax.random.split(key, 3)
    w1, b1, w2, b2 = init_params(pkey, num_inputs, num_actions, hidden_size)
    w1p, b1p, w2p, b2p = pad_params(w1, b1, w2, b2)

    def reference(x):
        h = jnp.maximum(x @ w1 + b1, 0.0)
        return jax.nn.softmax(h @ w2 + b2, axis=1)

    # --- small-batch (no-grid, whole-array VMEM) path ---
    batch = 2
    state = jax.random.normal(xkey, (batch, num_inputs), jnp.float32)
    probs = jax.block_until_ready(
        policy_network_forward(state, w1p, b1p, w2p, b2p, num_actions=num_actions))
    assert probs.shape == (batch, num_actions)
    assert jnp.allclose(probs, reference(state), atol=2e-3, rtol=2e-3)
    assert jnp.allclose(jnp.sum(probs, axis=1), 1.0, atol=1e-3)

    # --- large-batch (batch-tiled, pipelined, 2 even grid steps) path ---
    big = 2048
    state_b = jax.random.normal(xkey2, (big, num_inputs), jnp.float32)
    probs_b = jax.block_until_ready(
        policy_network_forward(state_b, w1p, b1p, w2p, b2p, num_actions=num_actions))
    assert probs_b.shape == (big, num_actions)
    assert jnp.allclose(probs_b, reference(state_b), atol=2e-3, rtol=2e-3)
    assert jnp.allclose(jnp.sum(probs_b, axis=1), 1.0, atol=1e-3)

    print("KERNEL_OK")
</pallas_src>

<mosaic_0001>
module attributes {stable_mosaic.version = 11 : i64} {
  func.func @policy_net_kernel(%arg0: memref<2x8xf32, #tpu.memory_space<vmem>>, %arg1: memref<8x128xf32, #tpu.memory_space<vmem>>, %arg2: memref<1x128xf32, #tpu.memory_space<vmem>>, %arg3: memref<128x128xf32, #tpu.memory_space<vmem>>, %arg4: memref<1x128xf32, #tpu.memory_space<vmem>>, %arg5: memref<2x6xf32, #tpu.memory_space<vmem>>) attributes {dimension_semantics = [], scalar_prefetch = 0 : i64, scratch_operands = 0 : i64, tpu.core_type = #tpu.core_type<tc>} {
    %c0 = arith.constant 0 : index
    %c0_0 = arith.constant 0 : index
    %0 = vector.load %arg0[%c0, %c0_0] : memref<2x8xf32, #tpu.memory_space<vmem>>, vector<2x8xf32>
    %c0_1 = arith.constant 0 : index
    %c0_2 = arith.constant 0 : index
    %1 = vector.load %arg1[%c0_1, %c0_2] : memref<8x128xf32, #tpu.memory_space<vmem>>, vector<8x128xf32>
    %cst = arith.constant dense<0.000000e+00> : vector<2x128xf32>
    %2 = tpu.matmul %0, %1, %cst {dimension_numbers = #tpu.dot_dimension_numbers<[1], [0], [0], [1], [0, 0, 1, 1], [], []>} : vector<2x8xf32>, vector<8x128xf32>, vector<2x128xf32> -> vector<2x128xf32>
    %c0_3 = arith.constant 0 : index
    %c0_4 = arith.constant 0 : index
    %3 = vector.load %arg2[%c0_3, %c0_4] : memref<1x128xf32, #tpu.memory_space<vmem>>, vector<1x128xf32>
    %4 = vector.broadcast %3 : vector<1x128xf32> to vector<2x128xf32>
    %5 = arith.addf %2, %4 : vector<2x128xf32>
    %cst_5 = arith.constant 0.000000e+00 : f32
    %6 = vector.broadcast %cst_5 : f32 to vector<2x128xf32>
    %7 = arith.maximumf %5, %6 : vector<2x128xf32>
    %c0_6 = arith.constant 0 : index
    %c0_7 = arith.constant 0 : index
    %8 = vector.load %arg3[%c0_6, %c0_7] : memref<128x128xf32, #tpu.memory_space<vmem>>, vector<128x128xf32>
    %cst_8 = arith.constant dense<0.000000e+00> : vector<2x128xf32>
    %9 = tpu.matmul %7, %8, %cst_8 {dimension_numbers = #tpu.dot_dimension_numbers<[1], [0], [0], [1], [0, 0, 1, 1], [], []>} : vector<2x128xf32>, vector<128x128xf32>, vector<2x128xf32> -> vector<2x128xf32>
    %c0_9 = arith.constant 0 : index
    %c0_10 = arith.constant 0 : index
    %10 = vector.load %arg4[%c0_9, %c0_10] : memref<1x128xf32, #tpu.memory_space<vmem>>, vector<1x128xf32>
    %11 = vector.broadcast %10 : vector<1x128xf32> to vector<2x128xf32>
    %12 = arith.addf %9, %11 : vector<2x128xf32>
    %cst_11 = arith.constant dense<0xFF800000> : vector<2xf32>
    %13 = vector.multi_reduction <maximumf>, %12, %cst_11 [1] : vector<2x128xf32> to vector<2xf32>
    %14 = vector.shape_cast %13 : vector<2xf32> to vector<2x1xf32>
    %15 = vector.broadcast %14 : vector<2x1xf32> to vector<2x128xf32>
    %16 = arith.subf %12, %15 : vector<2x128xf32>
    %17 = math.exp %16 : vector<2x128xf32>
    %cst_12 = arith.constant dense<0.000000e+00> : vector<2xf32>
    %18 = vector.multi_reduction <add>, %17, %cst_12 [1] : vector<2x128xf32> to vector<2xf32>
    %19 = vector.shape_cast %18 : vector<2xf32> to vector<2x1xf32>
    %20 = vector.broadcast %19 : vector<2x1xf32> to vector<2x128xf32>
    %21 = arith.divf %17, %20 : vector<2x128xf32>
    %22 = vector.extract_strided_slice %21 {offsets = [0, 0], sizes = [2, 6], strides = [1, 1]} : vector<2x128xf32> to vector<2x6xf32>
    %c0_13 = arith.constant 0 : index
    %c0_14 = arith.constant 0 : index
    %23 = vector.load %arg5[%c0_13, %c0_14] : memref<2x6xf32, #tpu.memory_space<vmem>>, vector<2x6xf32>
    tpu.vector_store %arg5[%c0_13, %c0_14], %22 {strides = array<i32>} : memref<2x6xf32, #tpu.memory_space<vmem>>, vector<2x6xf32>,
    return
  }
}

</mosaic_0001>

<llo_original>
// kernel: policy_network_forward.1
$region0: #{policy_network_forward.1}
  #allocation0 [shape = 'u32[]', space=smem, size = 0x4, offset = 0x4, fixed_abs, tag = 'smem constant byte address 0x4 - core index']
  #allocation1 [shape = 'u32[144,128]{1,0:T(1,128)}', space=vmem, size = 0x12000, scoped, tag = 'internal scratch']
  %s0 = inlined_call_operand.vmem [shape: f32[2,8], index: 0, kind: input, shape index: {}]
  %s1 = inlined_call_operand.hbm [shape: f32[8,128], index: 1, kind: input, shape index: {}]
  %s2 = inlined_call_operand.vmem [shape: f32[1,128], index: 2, kind: input, shape index: {}]
  %s3 = inlined_call_operand.hbm [shape: f32[128,128], index: 3, kind: input, shape index: {}]
  %s4 = inlined_call_operand.vmem [shape: f32[1,128], index: 4, kind: input, shape index: {}]
  %s5 = inlined_call_operand.hbm [shape: f32[2,6], index: 5, kind: output, shape index: {}]
  %s6 = sld [smem:[#allocation0]]
  $region38: #{policy_network_forward.1} parent=0
    _
  %s8 = ssub.s32 1, %s6
  %s9 = scalar_select 0, %s8, %s6
  $region1: #{policy_network_forward.1} parent=0
    #allocation2 [shape = 'u8[4096]{0}', space=vmem, size = 0x1000, scoped, tag = 'input window, operand 1, single buffered']
    #allocation3 [shape = 's32[1]{0}', space=sflag, size = 0x4, scoped, tag = 'scoped memory for policy_network_forward.1']
    #allocation4 [shape = 's32[1]{0}', space=sflag, size = 0x4, scoped, tag = 'scoped memory for policy_network_forward.1']
    #allocation5 [shape = 'u8[65536]{0}', space=vmem, size = 0x10000, scoped, tag = 'input window, operand 3, single buffered']
    #allocation6 [shape = 's32[1]{0}', space=sflag, size = 0x4, scoped, tag = 'scoped memory for policy_network_forward.1']
    #allocation7 [shape = 'u8[1024]{0}', space=vmem, size = 0x400, scoped, tag = 'output window, operand 0, single buffered']
    %10 = vsyncpa [#allocation3], 0
    %11 = vsyncpa [#allocation6], 0
    %12 = vsyncpa [#allocation4], 0
    // Predicated region
    $region2: #{policy_network_forward.1} parent=1 // pred_check
      _
    $region3: #{policy_network_forward.1} parent=1 // pred_check_branch
      %14 = sbr.rel (0) target = $region5
    $region4: #{policy_network_forward.1} parent=1 // pred_region
      _
    $region5: #{policy_network_forward.1} parent=1 // pred_fallthru
      _
    // Predicated region
    $region6: #{policy_network_forward.1} parent=1 // pred_check
      _
    $region7: #{policy_network_forward.1} parent=1 // pred_check_branch
      %16 = sbr.rel (0) target = $region9
    $region8: #{policy_network_forward.1} parent=1 // pred_region
      %s18 = ssub.s32 128, 128
      %19 = vsyncadd [#allocation3], %s18
      %s21 = sshll.u32 [#allocation2], 4
      %s22 = int_to_ptr.vmem [resolvable:$true] %s21
      %24 = dma.hbm_to_vmem [thread:$0]  %s1, 128, %s22, [#allocation3]
    $region9: #{policy_network_forward.1} parent=1 // pred_fallthru
      _
    // Predicated region
    $region10: #{policy_network_forward.1} parent=1 // pred_check
      _
    $region11: #{policy_network_forward.1} parent=1 // pred_check_branch
      %26 = sbr.rel (0) target = $region13
    $region12: #{policy_network_forward.1} parent=1 // pred_region
      _
    $region13: #{policy_network_forward.1} parent=1 // pred_fallthru
      _
    // Predicated region
    $region14: #{policy_network_forward.1} parent=1 // pred_check
      _
    $region15: #{policy_network_forward.1} parent=1 // pred_check_branch
      %28 = sbr.rel (0) target = $region17
    $region16: #{policy_network_forward.1} parent=1 // pred_region
      %s30 = ssub.s32 2048, 2048
      %31 = vsyncadd [#allocation6], %s30
      %s32 = sshll.u32 [#allocation5], 4
      %s33 = int_to_ptr.vmem [resolvable:$true] %s32
      %38 = dma.hbm_to_vmem [thread:$0]  %s3, 2048, %s33, [#allocation6], 128, 128, 8
    $region17: #{policy_network_forward.1} parent=1 // pred_fallthru
      _
    // Predicated region
    $region18: #{policy_network_forward.1} parent=1 // pred_check
      _
    $region19: #{policy_network_forward.1} parent=1 // pred_check_branch
      %40 = sbr.rel (0) target = $region21
    $region20: #{policy_network_forward.1} parent=1 // pred_region
      _
    $region21: #{policy_network_forward.1} parent=1 // pred_fallthru
      _
    // Predicated region
    $region22: #{policy_network_forward.1} parent=1 // pred_check
      _
    $region23: #{policy_network_forward.1} parent=1 // pred_check_branch
      %42 = sbr.rel (0) target = $region25
    $region24: #{policy_network_forward.1} parent=1 // pred_region
      %43 = dma.done [#allocation3], 128
    $region25: #{policy_network_forward.1} parent=1 // pred_fallthru
      _
    // Predicated region
    $region26: #{policy_network_forward.1} parent=1 // pred_check
      _
    $region27: #{policy_network_forward.1} parent=1 // pred_check_branch
      %45 = sbr.rel (0) target = $region29
    $region28: #{policy_network_forward.1} parent=1 // pred_region
      %46 = dma.done [#allocation6], 2048
    $region29: #{policy_network_forward.1} parent=1 // pred_fallthru
      _
    %v47 = vld [vmem:[%s0] sm:$0x3]
    %v48 = vld [vmem:[#allocation2] sm:$0xff]
    %v49 = vld [vmem:[%s2] sm:$0x1]
    %v51 = vlaneseq
    %v52 = vshrl.u32 %v51, 7
    %v53 = vsub.s32 0, %v52
    %v54 = vrot.slane %v49, %v53
    %vm56 = vcmask 64512
    %v58 = vsel %vm56, %v47, 0
    %60 = vmatprep.subr.mxu0 0.0
    %61 = vmatpush1.msra.mxu0 0.0
    %62 = vmatprep.subr.mxu0 0.0
    %63 = vmatpush1.msra.mxu0 0.0
    %64 = vmatprep.subr.mxu0 0.0
    %65 = vmatpush1.msra.mxu0 0.0
    %66 = vmatprep.subr.mxu0 0.0
    %67 = vmatpush1.msra.mxu0 0.0
    %68 = vmatprep.subr.mxu0 0.0
    %69 = vmatpush1.msra.mxu0 0.0
    %70 = vmatprep.subr.mxu0 0.0
    %71 = vmatpush1.msra.mxu0 0.0
    %72 = vmatprep.subr.mxu0 0.0
    %73 = vmatpush1.msra.mxu0 0.0
    %74 = vmatprep.subr.mxu0 0.0
    %75 = vmatpush1.msra.mxu0 0.0
    %76 = vmatprep.subr.mxu0 0.0
    %77 = vmatpush1.msra.mxu0 0.0
    %78 = vmatprep.subr.mxu0 0.0
    %79 = vmatpush1.msra.mxu0 0.0
    %80 = vmatprep.subr.mxu0 0.0
    %81 = vmatpush1.msra.mxu0 0.0
    %82 = vmatprep.subr.mxu0 0.0
    %83 = vmatpush1.msra.mxu0 0.0
    %84 = vmatprep.subr.mxu0 0.0
    %85 = vmatpush1.msra.mxu0 0.0
    %86 = vmatprep.subr.mxu0 0.0
    %87 = vmatpush1.msra.mxu0 0.0
    %88 = vmatprep.subr.mxu0 0.0
    %89 = vmatpush1.msra.mxu0 0.0
    %90 = vmatprep.subr.mxu0 0.0
    %91 = vmatpush1.msra.mxu0 %v48
    %92 = vmatprep.subr.mxu0 0.0
    %93 = vmatpush2.msra.mxu0 0.0
    %94 = vmatprep.subr.mxu0 0.0
    %95 = vmatpush2.msra.mxu0 0.0
    %96 = vmatprep.subr.mxu0 0.0
    %97 = vmatpush2.msra.mxu0 0.0
    %98 = vmatprep.subr.mxu0 0.0
    %99 = vmatpush2.msra.mxu0 0.0
    %100 = vmatprep.subr.mxu0 0.0
    %101 = vmatpush2.msra.mxu0 0.0
    %102 = vmatprep.subr.mxu0 0.0
    %103 = vmatpush2.msra.mxu0 0.0
    %104 = vmatprep.subr.mxu0 0.0
    %105 = vmatpush2.msra.mxu0 0.0
    %106 = vmatprep.subr.mxu0 0.0
    %107 = vmatpush2.msra.mxu0 0.0
    %108 = vmatprep.subr.mxu0 0.0
    %109 = vmatpush2.msra.mxu0 0.0
    %110 = vmatprep.subr.mxu0 0.0
    %111 = vmatpush2.msra.mxu0 0.0
    %112 = vmatprep.subr.mxu0 0.0
    %113 = vmatpush2.msra.mxu0 0.0
    %114 = vmatprep.subr.mxu0 0.0
    %115 = vmatpush2.msra.mxu0 0.0
    %116 = vmatprep.subr.mxu0 0.0
    %117 = vmatpush2.msra.mxu0 0.0
    %118 = vmatprep.subr.mxu0 0.0
    %119 = vmatpush2.msra.mxu0 0.0
    %120 = vmatprep.subr.mxu0 0.0
    %121 = vmatpush2.msra.mxu0 0.0
    %122 = vmatprep.subr.mxu0 0.0
    %123 = vmatpush2.msra.mxu0 0.0
    %124 = vmatprep.mubr.f32.mxu0 0.0
    %125 = vmatmul.mubr.f32.gmra.mxu0 %v58
    %v126 = vpop.f32.mrf.mxu0
    %v127 = vadd.f32 %v54, %v126
    %v128 = vpop.f32.mrf.mxu0
    %129 = vdwg.mxu0
    %v130 = vmax.f32 %v127, 0.0
    %v131 = vld [vmem:[#allocation5] sm:$0xff]
    %v132 = vld [vmem:[#allocation5 + $0x8] sm:$0xff]
    %v133 = vld [vmem:[#allocation5 + $0x10] sm:$0xff]
    %v134 = vld [vmem:[#allocation5 + $0x18] sm:$0xff]
    %v135 = vld [vmem:[#allocation5 + $0x20] sm:$0xff]
    %v136 = vld [vmem:[#allocation5 + $0x28] sm:$0xff]
    %v137 = vld [vmem:[#allocation5 + $0x30] sm:$0xff]
    %v138 = vld [vmem:[#allocation5 + $0x38] sm:$0xff]
    %v139 = vld [vmem:[#allocation5 + $0x40] sm:$0xff]
    %v140 = vld [vmem:[#allocation5 + $0x48] sm:$0xff]
    %v141 = vld [vmem:[#allocation5 + $0x50] sm:$0xff]
    %v142 = vld [vmem:[#allocation5 + $0x58] sm:$0xff]
    %v143 = vld [vmem:[#allocation5 + $0x60] sm:$0xff]
    %v144 = vld [vmem:[#allocation5 + $0x68] sm:$0xff]
    %v145 = vld [vmem:[#allocation5 + $0x70] sm:$0xff]
    %v146 = vld [vmem:[#allocation5 + $0x78] sm:$0xff]
    %v147 = vld [vmem:[%s4] sm:$0x1]
    %v149 = vlaneseq
    %v150 = vshrl.u32 %v149, 7
    %v151 = vsub.s32 0, %v150
    %v152 = vrot.slane %v147, %v151
    %154 = vmatprep.subr.mxu0 0.0
    %155 = vmatpush1.msra.mxu0 %v146
    %156 = vmatprep.subr.mxu0 0.0
    %157 = vmatpush1.msra.mxu0 %v145
    %158 = vmatprep.subr.mxu0 0.0
    %159 = vmatpush1.msra.mxu0 %v144
    %160 = vmatprep.subr.mxu0 0.0
    %161 = vmatpush1.msra.mxu0 %v143
    %162 = vmatprep.subr.mxu0 0.0
    %163 = vmatpush1.msra.mxu0 %v142
    %164 = vmatprep.subr.mxu0 0.0
    %165 = vmatpush1.msra.mxu0 %v141
    %166 = vmatprep.subr.mxu0 0.0
    %167 = vmatpush1.msra.mxu0 %v140
    %168 = vmatprep.subr.mxu0 0.0
    %169 = vmatpush1.msra.mxu0 %v139
    %170 = vmatprep.subr.mxu0 0.0
    %171 = vmatpush1.msra.mxu0 %v138
    %172 = vmatprep.subr.mxu0 0.0
    %173 = vmatpush1.msra.mxu0 %v137
    %174 = vmatprep.subr.mxu0 0.0
    %175 = vmatpush1.msra.mxu0 %v136
    %176 = vmatprep.subr.mxu0 0.0
    %177 = vmatpush1.msra.mxu0 %v135
    %178 = vmatprep.subr.mxu0 0.0
    %179 = vmatpush1.msra.mxu0 %v134
    %180 = vmatprep.subr.mxu0 0.0
    %181 = vmatpush1.msra.mxu0 %v133
    %182 = vmatprep.subr.mxu0 0.0
    %183 = vmatpush1.msra.mxu0 %v132
    %184 = vmatprep.subr.mxu0 0.0
    %185 = vmatpush1.msra.mxu0 %v131
    %186 = vmatprep.subr.mxu0 0.0
    %187 = vmatpush2.msra.mxu0 0.0
    %188 = vmatprep.subr.mxu0 0.0
    %189 = vmatpush2.msra.mxu0 0.0
    %190 = vmatprep.subr.mxu0 0.0
    %191 = vmatpush2.msra.mxu0 0.0
    %192 = vmatprep.subr.mxu0 0.0
    %193 = vmatpush2.msra.mxu0 0.0
    %194 = vmatprep.subr.mxu0 0.0
    %195 = vmatpush2.msra.mxu0 0.0
    %196 = vmatprep.subr.mxu0 0.0
    %197 = vmatpush2.msra.mxu0 0.0
    %198 = vmatprep.subr.mxu0 0.0
    %199 = vmatpush2.msra.mxu0 0.0
    %200 = vmatprep.subr.mxu0 0.0
    %201 = vmatpush2.msra.mxu0 0.0
    %202 = vmatprep.subr.mxu0 0.0
    %203 = vmatpush2.msra.mxu0 0.0
    %204 = vmatprep.subr.mxu0 0.0
    %205 = vmatpush2.msra.mxu0 0.0
    %206 = vmatprep.subr.mxu0 0.0
    %207 = vmatpush2.msra.mxu0 0.0
    %208 = vmatprep.subr.mxu0 0.0
    %209 = vmatpush2.msra.mxu0 0.0
    %210 = vmatprep.subr.mxu0 0.0
    %211 = vmatpush2.msra.mxu0 0.0
    %212 = vmatprep.subr.mxu0 0.0
    %213 = vmatpush2.msra.mxu0 0.0
    %214 = vmatprep.subr.mxu0 0.0
    %215 = vmatpush2.msra.mxu0 0.0
    %216 = vmatprep.subr.mxu0 0.0
    %217 = vmatpush2.msra.mxu0 0.0
    %218 = vmatprep.mubr.f32.mxu0 0.0
    %219 = vmatmul.mubr.f32.gmra.mxu0 %v130
    %v220 = vpop.f32.mrf.mxu0
    %v221 = vadd.f32 %v152, %v220
    %v222 = vpop.f32.mrf.mxu0
    %223 = vdwg.mxu0
    %vm224 = vcmask 1041408
    %v225 = vsel %vm224, %v221, -inf
    %226 = vmax.xlane.f32.xlu0 %v225
    %v227 = vpop.xlane.xlu0 %226
    %v228 = vsub.f32 %v221, %v227
    %v229 = vmul.f32 %v228, 1.442695
    %v230 = vpow.pop %v229
    %v231 = vsel %vm224, %v230, 0.0
    %232 = vadd.xlane.f32.xlu0 %v231
    %v233 = vpop.xlane.xlu0 %232
    %v234 = vrcp.pop %v233
    %v235 = vmul.f32 %v230, %v234
    %vm236 = vcmask 41984
    %237 = vst.msk [vmem:[#allocation7] sm:$0x3] %vm236, %v235
    // Predicated region
    $region30: #{policy_network_forward.1} parent=1 // pred_check
      _
    $region31: #{policy_network_forward.1} parent=1 // pred_check_branch
      %239 = sbr.rel (0) target = $region33
    $region32: #{policy_network_forward.1} parent=1 // pred_region
      %s241 = ssub.s32 32, 32
      %242 = vsyncadd [#allocation4], %s241
      %s244 = sshll.u32 [#allocation7], 4
      %s245 = int_to_ptr.vmem [resolvable:$true] %s244
      %247 = dma.vmem_to_hbm [thread:$0]  %s245, 32, %s5, [#allocation4]
    $region33: #{policy_network_forward.1} parent=1 // pred_fallthru
      _
    // Predicated region
    $region34: #{policy_network_forward.1} parent=1 // pred_check
      _
    $region35: #{policy_network_forward.1} parent=1 // pred_check_branch
      %249 = sbr.rel (0) target = $region37
    $region36: #{policy_network_forward.1} parent=1 // pred_region
      %250 = dma.done [#allocation4], 32
    $region37: #{policy_network_forward.1} parent=1 // pred_fallthru
      _
    %251 = vsyncpa [#allocation3], 1
    %252 = vsyncpa [#allocation6], 1
    %253 = vsyncpa [#allocation4], 1

</llo_original>
